<compile_context>
chip_gen: v6e
topology: v6e:2x2x1
jax: 0.10.0
libtpu: 0.0.40
codegen_flags: <defaults>
</compile_context>

<pallas_src>
import functools

import jax
import jax.numpy as jnp
from jax.experimental import pallas as pl
from jax.experimental.pallas import tpu as pltpu


def _cdiv(a, b):
    return -(-a // b)


def _round_up(a, m):
    return _cdiv(a, m) * m


def _softplus(x):
    # Match torch.nn.Softplus(beta=1, threshold=20): identity for x > 20.
    # jnp.minimum guards exp overflow on the discarded branch.
    twenty = jnp.asarray(20.0, x.dtype)
    return jnp.where(x > twenty, x, jnp.log1p(jnp.exp(jnp.minimum(x, twenty))))


def mlp_kernel(x_ref, w1_ref, b1_ref, w2_ref, b2_ref, w3_ref, b3_ref, o_ref,
               *, act_dtype):
    # x_ref holds a contiguous (tb, 10) row block of the (B, 10) input.
    # Layer 1 contracts both minor (feature) dims -> feature-major (20, tb)
    # output directly; no host-side transpose of x is ever materialized.
    h1 = jax.lax.dot_general(
        w1_ref[...], x_ref[...],
        dimension_numbers=(((1,), (1,)), ((), ())),
        preferred_element_type=jnp.float32) + b1_ref[...]              # (20, tb)
    h1 = _softplus(h1.astype(act_dtype)).astype(jnp.float32)
    h2 = jnp.dot(w2_ref[...], h1,
                 preferred_element_type=jnp.float32) + b2_ref[...]     # (5, tb)
    h2 = _softplus(h2.astype(act_dtype)).astype(jnp.float32)
    # Final 5 -> 1 layer: VPU mul + sublane (XLU) reduce -> lane-dense (1, tb).
    out = jnp.sum(w3_ref[...] * h2, axis=0, keepdims=True) + b3_ref[...]
    o_ref[...] = out.astype(o_ref.dtype)


def neural_network_forward(x, params, *, tb_max=4096, act_dtype=jnp.float32):
    """Forward pass of the 10 -> 20 -> 5 -> 1 Softplus MLP.

    x: (B, 10) float32 in the standard PyTorch nn.Linear layout; consumed
       directly from HBM (no host-side transpose or pad).
    params (PyTorch layout): w1 (20,10), b1 (20,1), w2 (5,20), b2 (5,1),
                             w3 (5,1) [= torch W3.T], b3 (1,1).
    tb_max: target batch-tile size (sweep 2048-8192; 4096 fits all chips).
    act_dtype: jnp.bfloat16 runs the softplus transcendentals ~2x faster on
       v6e/v7x EUP; keep jnp.float32 on v5e or when f32 accuracy is required.
    Returns (B, 1) float32.
    """
    B, F = x.shape
    w1, b1, w2, b2, w3, b3 = (params[k] for k in
                              ("w1", "b1", "w2", "b2", "w3", "b3"))
    assert F == w1.shape[1]

    tb_max = max(128, (int(tb_max) // 128) * 128)
    if B < 256:
        # Single exact full-array block (block dims == array dims, any B).
        tb, grid = B, 1
    else:
        # tb multiple of 128 (output lane axis); grid >= 2 (and even when it
        # matters) so the "parallel" axis feeds both v7x TensorCores; only the
        # last block is ragged, so padded work is bounded by < tb columns.
        n = max(2, _cdiv(B, tb_max))
        if n % 2:
            n += 1
        tb = min(tb_max, _round_up(_cdiv(B, n), 128))
        grid = _cdiv(B, tb)

    kernel = functools.partial(mlp_kernel, act_dtype=act_dtype)
    # Constant index_map -> tiny weights/biases stay VMEM-resident across steps.
    const = lambda a: pl.BlockSpec(a.shape, lambda i: (0, 0))

    out_t = pl.pallas_call(
        kernel,
        out_shape=jax.ShapeDtypeStruct((1, B), jnp.float32),
        grid=(grid,),
        in_specs=[
            pl.BlockSpec((tb, F), lambda i: (i, 0)),   # contiguous HBM row block
            const(w1), const(b1),
            const(w2), const(b2),
            const(w3), const(b3),
        ],
        out_specs=pl.BlockSpec((1, tb), lambda i: (0, i)),  # lane-dense stores
        compiler_params=pltpu.CompilerParams(
            dimension_semantics=("parallel",)),
    )(x, w1, b1, w2, b2, w3, b3)

    # (1, B) -> (B, 1) is a pure reshape of contiguous data (free).
    return out_t.reshape(B, 1)


def init_params(key):
    """Deterministic init mimicking PyTorch's uniform(-1/sqrt(fan_in), +)."""
    def linear(key, fan_in, fan_out):
        kw, kb = jax.random.split(key)
        bound = 1.0 / jnp.sqrt(float(fan_in))
        # PyTorch convention: W is (out, in); store bias as a column (out, 1).
        w = jax.random.uniform(kw, (fan_out, fan_in), jnp.float32, -bound, bound)
        b = jax.random.uniform(kb, (fan_out, 1), jnp.float32, -bound, bound)
        return w, b

    k1, k2, k3 = jax.random.split(key, 3)
    w1, b1 = linear(k1, 10, 20)
    w2, b2 = linear(k2, 20, 5)
    w3t, b3 = linear(k3, 5, 1)          # w3t is (1, 5) torch layout
    return dict(w1=w1, b1=b1, w2=w2, b2=b2, w3=w3t.T, b3=b3)  # w3 stored (5, 1)


def reference_forward(x, params):
    """Pure-JAX reference in the standard (B, feature) layout."""
    h = _softplus(x @ params["w1"].T + params["b1"].T)
    h = _softplus(h @ params["w2"].T + params["b2"].T)
    return h @ params["w3"] + params["b3"].T


if __name__ == "__main__":
    key = jax.random.PRNGKey(0)
    kx, kx2, kx3, kp = jax.random.split(key, 4)
    params = init_params(kp)

    # Small shape consistent with the module (batch=8, in_features=10):
    # exercises the exact single full-array block path.
    B = 8
    x = jax.random.normal(kx, (B, 10), jnp.float32)
    out = jax.block_until_ready(neural_network_forward(x, params))
    ref = reference_forward(x, params)
    assert out.shape == (B, 1)
    assert jnp.allclose(out, ref, atol=1e-5, rtol=1e-5)

    # Multi-tile path with a ragged (clipped) last block.
    B2 = 300
    x2 = jax.random.normal(kx2, (B2, 10), jnp.float32)
    out2 = jax.block_until_ready(neural_network_forward(x2, params, tb_max=128))
    ref2 = reference_forward(x2, params)
    assert out2.shape == (B2, 1)
    assert jnp.allclose(out2, ref2, atol=1e-5, rtol=1e-5)

    # Default-tb path (adaptive tile, grid >= 2, ragged last block).
    B3 = 1000
    x3 = jax.random.normal(kx3, (B3, 10), jnp.float32)
    out3 = jax.block_until_ready(neural_network_forward(x3, params))
    ref3 = reference_forward(x3, params)
    assert out3.shape == (B3, 1)
    assert jnp.allclose(out3, ref3, atol=1e-5, rtol=1e-5)

    print("KERNEL_OK")
</pallas_src>

<mosaic_0001>
module attributes {stable_mosaic.version = 11 : i64} {
  func.func @mlp_kernel(%arg0: i32, %arg1: memref<8x10xf32, #tpu.memory_space<vmem>>, %arg2: memref<20x10xf32, #tpu.memory_space<vmem>>, %arg3: memref<20x1xf32, #tpu.memory_space<vmem>>, %arg4: memref<5x20xf32, #tpu.memory_space<vmem>>, %arg5: memref<5x1xf32, #tpu.memory_space<vmem>>, %arg6: memref<5x1xf32, #tpu.memory_space<vmem>>, %arg7: memref<1x1xf32, #tpu.memory_space<vmem>>, %arg8: memref<1x8xf32, #tpu.memory_space<vmem>>) attributes {dimension_semantics = [#tpu.dimension_semantics<parallel>], iteration_bounds = array<i64: 1>, scalar_prefetch = 0 : i64, scratch_operands = 0 : i64, tpu.core_type = #tpu.core_type<tc>, window_params = [{transform_indices = @transform_0, window_bounds = array<i64: 8, 10>}, {pipeline_mode = #tpu.pipeline_mode<synchronous>, transform_indices = @transform_1, window_bounds = array<i64: 20, 10>}, {pipeline_mode = #tpu.pipeline_mode<synchronous>, transform_indices = @transform_2, window_bounds = array<i64: 20, 1>}, {pipeline_mode = #tpu.pipeline_mode<synchronous>, transform_indices = @transform_3, window_bounds = array<i64: 5, 20>}, {pipeline_mode = #tpu.pipeline_mode<synchronous>, transform_indices = @transform_4, window_bounds = array<i64: 5, 1>}, {pipeline_mode = #tpu.pipeline_mode<synchronous>, transform_indices = @transform_5, window_bounds = array<i64: 5, 1>}, {pipeline_mode = #tpu.pipeline_mode<synchronous>, transform_indices = @transform_6, window_bounds = array<i64: 1, 1>}, {transform_indices = @transform_7, window_bounds = array<i64: 1, 8>}]} {
    %c0 = arith.constant 0 : index
    %c0_0 = arith.constant 0 : index
    %0 = vector.load %arg2[%c0, %c0_0] : memref<20x10xf32, #tpu.memory_space<vmem>>, vector<20x10xf32>
    %c0_1 = arith.constant 0 : index
    %c0_2 = arith.constant 0 : index
    %1 = vector.load %arg1[%c0_1, %c0_2] : memref<8x10xf32, #tpu.memory_space<vmem>>, vector<8x10xf32>
    %cst = arith.constant dense<0.000000e+00> : vector<20x8xf32>
    %2 = tpu.matmul %0, %1, %cst {dimension_numbers = #tpu.dot_dimension_numbers<[1], [1], [0], [0], [0, 0, 1, 0], [], []>} : vector<20x10xf32>, vector<8x10xf32>, vector<20x8xf32> -> vector<20x8xf32>
    %c0_3 = arith.constant 0 : index
    %c0_4 = arith.constant 0 : index
    %3 = vector.load %arg3[%c0_3, %c0_4] : memref<20x1xf32, #tpu.memory_space<vmem>>, vector<20x1xf32>
    %4 = vector.broadcast %3 : vector<20x1xf32> to vector<20x8xf32>
    %5 = arith.addf %2, %4 : vector<20x8xf32>
    %cst_5 = arith.constant 2.000000e+01 : f32
    %6 = vector.broadcast %cst_5 : f32 to vector<20x8xf32>
    %7 = arith.cmpf ogt, %5, %6 : vector<20x8xf32>
    %cst_6 = arith.constant 2.000000e+01 : f32
    %8 = vector.broadcast %cst_6 : f32 to vector<20x8xf32>
    %9 = arith.minimumf %5, %8 : vector<20x8xf32>
    %10 = math.exp %9 : vector<20x8xf32>
    %11 = math.log1p %10 : vector<20x8xf32>
    %12 = arith.select %7, %5, %11 : vector<20x8xi1>, vector<20x8xf32>
    %c0_7 = arith.constant 0 : index
    %c0_8 = arith.constant 0 : index
    %13 = vector.load %arg4[%c0_7, %c0_8] : memref<5x20xf32, #tpu.memory_space<vmem>>, vector<5x20xf32>
    %cst_9 = arith.constant dense<0.000000e+00> : vector<5x8xf32>
    %14 = tpu.matmul %13, %12, %cst_9 {dimension_numbers = #tpu.dot_dimension_numbers<[1], [0], [0], [1], [0, 0, 1, 1], [], []>} : vector<5x20xf32>, vector<20x8xf32>, vector<5x8xf32> -> vector<5x8xf32>
    %c0_10 = arith.constant 0 : index
    %c0_11 = arith.constant 0 : index
    %15 = vector.load %arg5[%c0_10, %c0_11] : memref<5x1xf32, #tpu.memory_space<vmem>>, vector<5x1xf32>
    %16 = vector.broadcast %15 : vector<5x1xf32> to vector<5x8xf32>
    %17 = arith.addf %14, %16 : vector<5x8xf32>
    %cst_12 = arith.constant 2.000000e+01 : f32
    %18 = vector.broadcast %cst_12 : f32 to vector<5x8xf32>
    %19 = arith.cmpf ogt, %17, %18 : vector<5x8xf32>
    %cst_13 = arith.constant 2.000000e+01 : f32
    %20 = vector.broadcast %cst_13 : f32 to vector<5x8xf32>
    %21 = arith.minimumf %17, %20 : vector<5x8xf32>
    %22 = math.exp %21 : vector<5x8xf32>
    %23 = math.log1p %22 : vector<5x8xf32>
    %24 = arith.select %19, %17, %23 : vector<5x8xi1>, vector<5x8xf32>
    %c0_14 = arith.constant 0 : index
    %c0_15 = arith.constant 0 : index
    %25 = vector.load %arg6[%c0_14, %c0_15] : memref<5x1xf32, #tpu.memory_space<vmem>>, vector<5x1xf32>
    %26 = vector.broadcast %25 : vector<5x1xf32> to vector<5x8xf32>
    %27 = arith.mulf %26, %24 : vector<5x8xf32>
    %cst_16 = arith.constant dense<0.000000e+00> : vector<8xf32>
    %28 = vector.multi_reduction <add>, %27, %cst_16 [0] : vector<5x8xf32> to vector<8xf32>
    %29 = vector.shape_cast %28 : vector<8xf32> to vector<1x8xf32>
    %c0_17 = arith.constant 0 : index
    %c0_18 = arith.constant 0 : index
    %30 = vector.load %arg7[%c0_17, %c0_18] : memref<1x1xf32, #tpu.memory_space<vmem>>, vector<1x1xf32>
    %31 = vector.broadcast %30 : vector<1x1xf32> to vector<1x8xf32>
    %32 = arith.addf %29, %31 : vector<1x8xf32>
    %c0_19 = arith.constant 0 : index
    %c0_20 = arith.constant 0 : index
    %33 = vector.load %arg8[%c0_19, %c0_20] : memref<1x8xf32, #tpu.memory_space<vmem>>, vector<1x8xf32>
    tpu.vector_store %arg8[%c0_19, %c0_20], %32 {strides = array<i32>} : memref<1x8xf32, #tpu.memory_space<vmem>>, vector<1x8xf32>,
    return
  }
  func.func @transform_0(%arg0: i32) -> (i32, i32) {
    %c0_i32 = arith.constant 0 : i32
    %c0_i32_0 = arith.constant 0 : i32
    return %arg0, %c0_i32 : i32, i32
  }
  func.func @transform_1(%arg0: i32) -> (i32, i32) {
    %c0_i32 = arith.constant 0 : i32
    %c0_i32_0 = arith.constant 0 : i32
    %c0_i32_1 = arith.constant 0 : i32
    return %c0_i32, %c0_i32_0 : i32, i32
  }
  func.func @transform_2(%arg0: i32) -> (i32, i32) {
    %c0_i32 = arith.constant 0 : i32
    %c0_i32_0 = arith.constant 0 : i32
    %c0_i32_1 = arith.constant 0 : i32
    return %c0_i32, %c0_i32_0 : i32, i32
  }
  func.func @transform_3(%arg0: i32) -> (i32, i32) {
    %c0_i32 = arith.constant 0 : i32
    %c0_i32_0 = arith.constant 0 : i32
    %c0_i32_1 = arith.constant 0 : i32
    return %c0_i32, %c0_i32_0 : i32, i32
  }
  func.func @transform_4(%arg0: i32) -> (i32, i32) {
    %c0_i32 = arith.constant 0 : i32
    %c0_i32_0 = arith.constant 0 : i32
    %c0_i32_1 = arith.constant 0 : i32
    return %c0_i32, %c0_i32_0 : i32, i32
  }
  func.func @transform_5(%arg0: i32) -> (i32, i32) {
    %c0_i32 = arith.constant 0 : i32
    %c0_i32_0 = arith.constant 0 : i32
    %c0_i32_1 = arith.constant 0 : i32
    return %c0_i32, %c0_i32_0 : i32, i32
  }
  func.func @transform_6(%arg0: i32) -> (i32, i32) {
    %c0_i32 = arith.constant 0 : i32
    %c0_i32_0 = arith.constant 0 : i32
    %c0_i32_1 = arith.constant 0 : i32
    return %c0_i32, %c0_i32_0 : i32, i32
  }
  func.func @transform_7(%arg0: i32) -> (i32, i32) {
    %c0_i32 = arith.constant 0 : i32
    %c0_i32_0 = arith.constant 0 : i32
    return %c0_i32, %arg0 : i32, i32
  }
}

</mosaic_0001>

<llo_original>
// kernel: tpu_custom_call.1
$region0: #{tpu_custom_call.1}
  #allocation0 [shape = 'u32[]', space=smem, size = 0x4, offset = 0x4, fixed_abs, tag = 'smem constant byte address 0x4 - core index']
  #allocation1 [shape = 'u32[144,128]{1,0:T(1,128)}', space=vmem, size = 0x12000, scoped, tag = 'internal scratch']
  #allocation2 [shape = 'f32[1,1]{1,0:T(1,128)S(1)}', space=vmem, size = 0x200, scoped, tag = 'scoped memory for tpu_custom_call.1']
  %s0 = inlined_call_operand.vmem [shape: f32[8,10], index: 0, kind: input, shape index: {}]
  %s1 = inlined_call_operand.vmem [shape: f32[20,10], index: 1, kind: input, shape index: {}]
  %s2 = inlined_call_operand.vmem [shape: f32[20,1], index: 2, kind: input, shape index: {}]
  %s3 = inlined_call_operand.vmem [shape: f32[5,20], index: 3, kind: input, shape index: {}]
  %s4 = inlined_call_operand.vmem [shape: f32[5,1], index: 4, kind: input, shape index: {}]
  %s5 = inlined_call_operand.vmem [shape: f32[5,1], index: 5, kind: input, shape index: {}]
  %s6 = inlined_call_operand.<no memory space> [shape: f32[1,1], index: 6, kind: input, shape index: {}]
  %s7 = inlined_call_operand.hbm [shape: f32[1,8], index: 7, kind: output, shape index: {}]
  %s8 = sld [smem:[#allocation0]]
  $region38: #{tpu_custom_call.1} parent=0
    _
  %s10 = ssub.s32 1, %s8
  %s11 = scalar_select 0, %s10, %s8
  %v12 = vstv %s6
  %13 = vst [vmem:[#allocation2] sm:$0x1] %v12
  $region1: #{tpu_custom_call.1} parent=0
    #allocation3 [shape = 'u8[512]{0}', space=vmem, size = 0x400, scoped, tag = 'output window, operand 0, single buffered']
    #allocation4 [shape = 's32[1]{0}', space=sflag, size = 0x4, scoped, tag = 'scoped memory for tpu_custom_call.1']
    %14 = vsyncpa [#allocation4], 0
    // Predicated region
    $region2: #{tpu_custom_call.1} parent=1 // pred_check
      _
    $region3: #{tpu_custom_call.1} parent=1 // pred_check_branch
      %16 = sbr.rel (0) target = $region5
    $region4: #{tpu_custom_call.1} parent=1 // pred_region
      _
    $region5: #{tpu_custom_call.1} parent=1 // pred_fallthru
      _
    // Predicated region
    $region6: #{tpu_custom_call.1} parent=1 // pred_check
      _
    $region7: #{tpu_custom_call.1} parent=1 // pred_check_branch
      %18 = sbr.rel (0) target = $region9
    $region8: #{tpu_custom_call.1} parent=1 // pred_region
      _
    $region9: #{tpu_custom_call.1} parent=1 // pred_fallthru
      _
    // Predicated region
    $region10: #{tpu_custom_call.1} parent=1 // pred_check
      _
    $region11: #{tpu_custom_call.1} parent=1 // pred_check_branch
      %20 = sbr.rel (0) target = $region13
    $region12: #{tpu_custom_call.1} parent=1 // pred_region
      _
    $region13: #{tpu_custom_call.1} parent=1 // pred_fallthru
      _
    // Predicated region
    $region14: #{tpu_custom_call.1} parent=1 // pred_check
      _
    $region15: #{tpu_custom_call.1} parent=1 // pred_check_branch
      %22 = sbr.rel (0) target = $region17
    $region16: #{tpu_custom_call.1} parent=1 // pred_region
      _
    $region17: #{tpu_custom_call.1} parent=1 // pred_fallthru
      _
    // Predicated region
    $region18: #{tpu_custom_call.1} parent=1 // pred_check
      _
    $region19: #{tpu_custom_call.1} parent=1 // pred_check_branch
      %24 = sbr.rel (0) target = $region21
    $region20: #{tpu_custom_call.1} parent=1 // pred_region
      _
    $region21: #{tpu_custom_call.1} parent=1 // pred_fallthru
      _
    // Predicated region
    $region22: #{tpu_custom_call.1} parent=1 // pred_check
      _
    $region23: #{tpu_custom_call.1} parent=1 // pred_check_branch
      %26 = sbr.rel (0) target = $region25
    $region24: #{tpu_custom_call.1} parent=1 // pred_region
      _
    $region25: #{tpu_custom_call.1} parent=1 // pred_fallthru
      _
    // Predicated region
    $region26: #{tpu_custom_call.1} parent=1 // pred_check
      _
    $region27: #{tpu_custom_call.1} parent=1 // pred_check_branch
      %28 = sbr.rel (0) target = $region29
    $region28: #{tpu_custom_call.1} parent=1 // pred_region
      _
    $region29: #{tpu_custom_call.1} parent=1 // pred_fallthru
      _
    %v29 = vld [vmem:[%s1] sm:$0xff]
    %v30 = vld [vmem:[%s1 + $0x8] sm:$0xff]
    %v31 = vld [vmem:[%s1 + $0x10] sm:$0xf]
    %v32 = vld [vmem:[%s0] sm:$0xff]
    %v33 = vld [vmem:[%s2] sm:$0xff]
    %v34 = vld [vmem:[%s2 + $0x8] sm:$0xff]
    %v35 = vld [vmem:[%s2 + $0x10] sm:$0xf]
    %37 = vset.pattern.permute.xlu0 0
    %38 = vperm.xlu0 %37, %v33
    %v39 = vpop.permute.xlu0 %38
    %42 = vset.pattern.permute.xlu0 0
    %43 = vperm.xlu0 %42, %v34
    %v44 = vpop.permute.xlu0 %43
    %47 = vset.pattern.permute.xlu0 0
    %48 = vperm.xlu0 %47, %v35
    %v49 = vpop.permute.xlu0 %48
    %vm51 = vcmask 80896
    %v53 = vsel %vm51, %v29, 0
    %v56 = vsel %vm51, %v30, 0
    %v59 = vsel %vm51, %v31, 0
    %v62 = vsel %vm51, %v32, 0
    %64 = vmatprep.subr.mxu0 0.0
    %65 = vmatpush1.xpose.msra.mxu0 0.0
    %66 = vmatprep.subr.mxu0 0.0
    %67 = vmatpush1.xpose.msra.mxu0 0.0
    %68 = vmatprep.subr.mxu0 0.0
    %69 = vmatpush1.xpose.msra.mxu0 0.0
    %70 = vmatprep.subr.mxu0 0.0
    %71 = vmatpush1.xpose.msra.mxu0 0.0
    %72 = vmatprep.subr.mxu0 0.0
    %73 = vmatpush1.xpose.msra.mxu0 0.0
    %74 = vmatprep.subr.mxu0 0.0
    %75 = vmatpush1.xpose.msra.mxu0 0.0
    %76 = vmatprep.subr.mxu0 0.0
    %77 = vmatpush1.xpose.msra.mxu0 0.0
    %78 = vmatprep.subr.mxu0 0.0
    %79 = vmatpush1.xpose.msra.mxu0 0.0
    %80 = vmatprep.subr.mxu0 0.0
    %81 = vmatpush1.xpose.msra.mxu0 0.0
    %82 = vmatprep.subr.mxu0 0.0
    %83 = vmatpush1.xpose.msra.mxu0 0.0
    %84 = vmatprep.subr.mxu0 0.0
    %85 = vmatpush1.xpose.msra.mxu0 0.0
    %86 = vmatprep.subr.mxu0 0.0
    %87 = vmatpush1.xpose.msra.mxu0 0.0
    %88 = vmatprep.subr.mxu0 0.0
    %89 = vmatpush1.xpose.msra.mxu0 0.0
    %90 = vmatprep.subr.mxu0 0.0
    %91 = vmatpush1.xpose.msra.mxu0 0.0
    %92 = vmatprep.subr.mxu0 0.0
    %93 = vmatpush1.xpose.msra.mxu0 0.0
    %94 = vmatprep.subr.mxu0 0.0
    %95 = vmatpush1.xpose.msra.mxu0 %v62
    %96 = vmatprep.subr.mxu0 0.0
    %97 = vmatpush2.xpose.msra.mxu0 0.0
    %98 = vmatprep.subr.mxu0 0.0
    %99 = vmatpush2.xpose.msra.mxu0 0.0
    %100 = vmatprep.subr.mxu0 0.0
    %101 = vmatpush2.xpose.msra.mxu0 0.0
    %102 = vmatprep.subr.mxu0 0.0
    %103 = vmatpush2.xpose.msra.mxu0 0.0
    %104 = vmatprep.subr.mxu0 0.0
    %105 = vmatpush2.xpose.msra.mxu0 0.0
    %106 = vmatprep.subr.mxu0 0.0
    %107 = vmatpush2.xpose.msra.mxu0 0.0
    %108 = vmatprep.subr.mxu0 0.0
    %109 = vmatpush2.xpose.msra.mxu0 0.0
    %110 = vmatprep.subr.mxu0 0.0
    %111 = vmatpush2.xpose.msra.mxu0 0.0
    %112 = vmatprep.subr.mxu0 0.0
    %113 = vmatpush2.xpose.msra.mxu0 0.0
    %114 = vmatprep.subr.mxu0 0.0
    %115 = vmatpush2.xpose.msra.mxu0 0.0
    %116 = vmatprep.subr.mxu0 0.0
    %117 = vmatpush2.xpose.msra.mxu0 0.0
    %118 = vmatprep.subr.mxu0 0.0
    %119 = vmatpush2.xpose.msra.mxu0 0.0
    %120 = vmatprep.subr.mxu0 0.0
    %121 = vmatpush2.xpose.msra.mxu0 0.0
    %122 = vmatprep.subr.mxu0 0.0
    %123 = vmatpush2.xpose.msra.mxu0 0.0
    %124 = vmatprep.subr.mxu0 0.0
    %125 = vmatpush2.xpose.msra.mxu0 0.0
    %126 = vmatprep.subr.mxu0 0.0
    %127 = vmatpush2.xpose.msra.mxu0 0.0
    %128 = vmatprep.mubr.f32.mxu0 0.0
    %129 = vmatmul.mubr.f32.gmra.mxu0 %v53
    %v130 = vpop.f32.mrf.mxu0
    %v131 = vadd.f32 %v39, %v130
    %v132 = vpop.f32.mrf.mxu0
    %133 = vmatprep.mubr.f32.mxu0 0.0
    %134 = vmatmul.mubr.f32.gmra.mxu0 %v56
    %v135 = vpop.f32.mrf.mxu0
    %v136 = vadd.f32 %v44, %v135
    %v137 = vpop.f32.mrf.mxu0
    %138 = vmatprep.mubr.f32.mxu0 0.0
    %139 = vmatmul.mubr.f32.gmra.mxu0 %v59
    %v140 = vpop.f32.mrf.mxu0
    %v141 = vadd.f32 %v49, %v140
    %v142 = vpop.f32.mrf.mxu0
    %143 = vdwg.mxu0
    %vm144 = vcmp.gt.f32.partialorder %v131, 20.0
    %vm145 = vcmp.gt.f32.partialorder %v136, 20.0
    %vm146 = vcmp.gt.f32.partialorder %v141, 20.0
    %v147 = vmin.f32 %v131, 20.0
    %v148 = vmin.f32 %v136, 20.0
    %v149 = vmin.f32 %v141, 20.0
    %v150 = vmul.f32 %v147, 1.442695
    %v151 = vpow.pop %v150
    %v152 = vmul.f32 %v148, 1.442695
    %v153 = vpow.pop %v152
    %v154 = vmul.f32 %v149, 1.442695
    %v155 = vpow.pop %v154
    %v156 = vadd.f32 %v151, 1.0
    %v157 = vlog2.pop %v156
    %v158 = vmul.f32 %v157, 0.6931472
    %v159 = vmul.f32 -0.5, %v151
    %v160 = vadd.f32 %v159, 1.0
    %v161 = vmul.f32 %v160, %v151
    %v162 = vand.u32 2147483647, %v151
    %vm163 = vcmp.lt.f32.partialorder %v162, 0.0004427343
    %v164 = vsel %vm163, %v161, %v158
    %v165 = vadd.f32 %v153, 1.0
    %v166 = vlog2.pop %v165
    %v167 = vmul.f32 %v166, 0.6931472
    %v168 = vmul.f32 -0.5, %v153
    %v169 = vadd.f32 %v168, 1.0
    %v170 = vmul.f32 %v169, %v153
    %v171 = vand.u32 2147483647, %v153
    %vm172 = vcmp.lt.f32.partialorder %v171, 0.0004427343
    %v173 = vsel %vm172, %v170, %v167
    %v174 = vadd.f32 %v155, 1.0
    %v175 = vlog2.pop %v174
    %v176 = vmul.f32 %v175, 0.6931472
    %v177 = vmul.f32 -0.5, %v155
    %v178 = vadd.f32 %v177, 1.0
    %v179 = vmul.f32 %v178, %v155
    %v180 = vand.u32 2147483647, %v155
    %vm181 = vcmp.lt.f32.partialorder %v180, 0.0004427343
    %v182 = vsel %vm181, %v179, %v176
    %v183 = vsel %vm144, %v131, %v164
    %v184 = vsel %vm145, %v136, %v173
    %v185 = vsel %vm146, %v141, %v182
    %v186 = vld [vmem:[%s3] sm:$0x1f]
    %v187 = vld [vmem:[%s4] sm:$0x1f]
    %189 = vset.pattern.permute.xlu0 0
    %190 = vperm.xlu0 %189, %v187
    %v191 = vpop.permute.xlu0 %190
    %vm193 = vcmask 162816
    %v195 = vsel %vm193, %v186, 0
    %vm197 = vcmask 1043456
    %v199 = vsel %vm197, %v185, 0
    %201 = vmatprep.subr.mxu0 0.0
    %202 = vmatpush1.msra.mxu0 0.0
    %203 = vmatprep.subr.mxu0 0.0
    %204 = vmatpush1.msra.mxu0 0.0
    %205 = vmatprep.subr.mxu0 0.0
    %206 = vmatpush1.msra.mxu0 0.0
    %207 = vmatprep.subr.mxu0 0.0
    %208 = vmatpush1.msra.mxu0 0.0
    %209 = vmatprep.subr.mxu0 0.0
    %210 = vmatpush1.msra.mxu0 0.0
    %211 = vmatprep.subr.mxu0 0.0
    %212 = vmatpush1.msra.mxu0 0.0
    %213 = vmatprep.subr.mxu0 0.0
    %214 = vmatpush1.msra.mxu0 0.0
    %215 = vmatprep.subr.mxu0 0.0
    %216 = vmatpush1.msra.mxu0 0.0
    %217 = vmatprep.subr.mxu0 0.0
    %218 = vmatpush1.msra.mxu0 0.0
    %219 = vmatprep.subr.mxu0 0.0
    %220 = vmatpush1.msra.mxu0 0.0
    %221 = vmatprep.subr.mxu0 0.0
    %222 = vmatpush1.msra.mxu0 0.0
    %223 = vmatprep.subr.mxu0 0.0
    %224 = vmatpush1.msra.mxu0 0.0
    %225 = vmatprep.subr.mxu0 0.0
    %226 = vmatpush1.msra.mxu0 0.0
    %227 = vmatprep.subr.mxu0 0.0
    %228 = vmatpush1.msra.mxu0 %v199
    %229 = vmatprep.subr.mxu0 0.0
    %230 = vmatpush1.msra.mxu0 %v184
    %231 = vmatprep.subr.mxu0 0.0
    %232 = vmatpush1.msra.mxu0 %v183
    %233 = vmatprep.subr.mxu0 0.0
    %234 = vmatpush2.msra.mxu0 0.0
    %235 = vmatprep.subr.mxu0 0.0
    %236 = vmatpush2.msra.mxu0 0.0
    %237 = vmatprep.subr.mxu0 0.0
    %238 = vmatpush2.msra.mxu0 0.0
    %239 = vmatprep.subr.mxu0 0.0
    %240 = vmatpush2.msra.mxu0 0.0
    %241 = vmatprep.subr.mxu0 0.0
    %242 = vmatpush2.msra.mxu0 0.0
    %243 = vmatprep.subr.mxu0 0.0
    %244 = vmatpush2.msra.mxu0 0.0
    %245 = vmatprep.subr.mxu0 0.0
    %246 = vmatpush2.msra.mxu0 0.0
    %247 = vmatprep.subr.mxu0 0.0
    %248 = vmatpush2.msra.mxu0 0.0
    %249 = vmatprep.subr.mxu0 0.0
    %250 = vmatpush2.msra.mxu0 0.0
    %251 = vmatprep.subr.mxu0 0.0
    %252 = vmatpush2.msra.mxu0 0.0
    %253 = vmatprep.subr.mxu0 0.0
    %254 = vmatpush2.msra.mxu0 0.0
    %255 = vmatprep.subr.mxu0 0.0
    %256 = vmatpush2.msra.mxu0 0.0
    %257 = vmatprep.subr.mxu0 0.0
    %258 = vmatpush2.msra.mxu0 0.0
    %259 = vmatprep.subr.mxu0 0.0
    %260 = vmatpush2.msra.mxu0 0.0
    %261 = vmatprep.subr.mxu0 0.0
    %262 = vmatpush2.msra.mxu0 0.0
    %263 = vmatprep.subr.mxu0 0.0
    %264 = vmatpush2.msra.mxu0 0.0
    %265 = vmatprep.mubr.f32.mxu0 0.0
    %266 = vmatmul.mubr.f32.gmra.mxu0 %v195
    %v267 = vpop.f32.mrf.mxu0
    %v268 = vadd.f32 %v191, %v267
    %v269 = vpop.f32.mrf.mxu0
    %270 = vdwg.mxu0
    %vm271 = vcmp.gt.f32.partialorder %v268, 20.0
    %v272 = vmin.f32 %v268, 20.0
    %v273 = vmul.f32 %v272, 1.442695
    %v274 = vpow.pop %v273
    %v275 = vadd.f32 %v274, 1.0
    %v276 = vlog2.pop %v275
    %v277 = vmul.f32 %v276, 0.6931472
    %v278 = vmul.f32 -0.5, %v274
    %v279 = vadd.f32 %v278, 1.0
    %v280 = vmul.f32 %v279, %v274
    %v281 = vand.u32 2147483647, %v274
    %vm282 = vcmp.lt.f32.partialorder %v281, 0.0004427343
    %v283 = vsel %vm282, %v280, %v277
    %v284 = vsel %vm271, %v268, %v283
    %v285 = vld [vmem:[%s5] sm:$0x1f]
    %287 = vset.pattern.permute.xlu0 0
    %288 = vperm.xlu0 %287, %v285
    %v289 = vpop.permute.xlu0 %288
    %v291 = vmul.f32 %v289, %v284
    %vm292 = vcmask 61440
    %v293 = vsel %vm292, %v291, 0.0
    %v294 = vrot.slane %v293, 4
    %v295 = vadd.f32 %v293, %v294
    %v296 = vrot.slane %v295, 2
    %v297 = vadd.f32 %v295, %v296
    %v298 = vrot.slane %v297, 1
    %v299 = vadd.f32 %v297, %v298
    %v300 = vld [vmem:[#allocation2] sm:$0x1]
    %302 = vset.pattern.permute.xlu0 0
    %303 = vperm.xlu0 %302, %v300
    %v304 = vpop.permute.xlu0 %303
    %v306 = vlaneseq
    %v307 = vshrl.u32 %v306, 7
    %v308 = vsub.s32 0, %v307
    %v309 = vrot.slane %v304, %v308
    %v310 = vadd.f32 %v299, %v309
    %vm311 = vcmask 57344
    %312 = vst.msk [vmem:[#allocation3] sm:$0x1] %vm311, %v310
    // Predicated region
    $region30: #{tpu_custom_call.1} parent=1 // pred_check
      _
    $region31: #{tpu_custom_call.1} parent=1 // pred_check_branch
      %314 = sbr.rel (0) target = $region33
    $region32: #{tpu_custom_call.1} parent=1 // pred_region
      %s316 = ssub.s32 16, 16
      %317 = vsyncadd [#allocation4], %s316
      %s319 = sshll.u32 [#allocation3], 4
      %s320 = int_to_ptr.vmem [resolvable:$true] %s319
      %322 = dma.vmem_to_hbm [thread:$0]  %s320, 16, %s7, [#allocation4]
    $region33: #{tpu_custom_call.1} parent=1 // pred_fallthru
      _
    // Predicated region
    $region34: #{tpu_custom_call.1} parent=1 // pred_check
      _
    $region35: #{tpu_custom_call.1} parent=1 // pred_check_branch
      %324 = sbr.rel (0) target = $region37
    $region36: #{tpu_custom_call.1} parent=1 // pred_region
      %325 = dma.done [#allocation4], 16
    $region37: #{tpu_custom_call.1} parent=1 // pred_fallthru
      _
    %326 = vsyncpa [#allocation4], 1

</llo_original>
